<compile_context>
chip_gen: v5e
topology: v5e:2x2
jax: 0.10.0
libtpu: 0.0.40
codegen_flags: <defaults>
</compile_context>

<pallas_src>
import math

import jax
import jax.numpy as jnp
from jax.experimental import pallas as pl
from jax.experimental.pallas import tpu as pltpu


IN_FEATURES = 28 * 28      # 784 (multiple of 8 -> valid sublane dim for w1)
HIDDEN = 90
NUM_CLASSES = 10

H_PAD = 128                # 90  -> 128  (lane-dense hidden)
C_PAD = 128                # 10  -> 128  (lane-dense output block)

NEG_BIG = -1e30            # bias for padded class lanes -> exp() == 0 in log_softmax


def _round_up(x, m):
    return ((x + m - 1) // m) * m


def netfull_kernel(x_ref, w1_ref, b1_ref, w2_ref, b2_ref, o_ref):
    """One batch tile of the full forward pass.

    x_ref  : (TM, 784)   f32    raw flattened images (cast to bf16 in VMEM)
    w1_ref : (784, 128)  bf16   transposed torch weight 1, hidden zero-padded
    b1_ref : (1, 128)    f32    zero-padded bias 1
    w2_ref : (128, 128)  bf16   transposed torch weight 2, zero-padded
    b2_ref : (1, 128)    f32    bias 2, padded class lanes = -1e30
    o_ref  : (TM, 128)   f32    log-probabilities (cols 0..9 are real)
    """
    # linear1: bf16 MXU inputs, f32 accumulation (K=784 handled by Mosaic).
    x_bf16 = x_ref[...].astype(jnp.bfloat16)
    h = jnp.dot(x_bf16, w1_ref[...], preferred_element_type=jnp.float32)
    h = jnp.tanh(h + b1_ref[...])                      # f32 VPU/EUP

    # linear2: bf16 MXU inputs (|h| <= 1), f32 accumulation; padded hidden
    # rows of w2 are zero -> no contribution.
    logits = jnp.dot(h.astype(jnp.bfloat16), w2_ref[...],
                     preferred_element_type=jnp.float32) + b2_ref[...]

    # numerically-stable log_softmax over the lane-dense class axis; padded
    # lanes carry -1e30 so they never win the max and exp() to 0.
    m = jnp.max(logits, axis=-1, keepdims=True)
    z = logits - m
    lse = jnp.log(jnp.sum(jnp.exp(z), axis=-1, keepdims=True))
    o_ref[...] = (z - lse).astype(o_ref.dtype)


def _choose_tile_m(batch, tm):
    """Batch tile: as large as `tm`, but prefer >= 4 grid steps (megacore on
    v7x, pipelining everywhere) once tiles can stay >= 256 rows."""
    b8 = _round_up(batch, 8)
    tile = min(tm, b8)
    min_steps = 4
    if b8 // tile < min_steps:
        alt = _round_up(-(-b8 // min_steps), 8)        # ceil(b8/min_steps) -> mult of 8
        tile = min(tile, max(alt, 256))
        tile = min(tile, b8)
    return tile


def netfull_forward(x_nchw, w1_t, b1, w2_t, b2, tm=2048):
    """Flatten NCHW input, run the tiled Pallas kernel, slice back to (B, 10)."""
    batch = x_nchw.shape[0]
    x_flat = x_nchw.reshape(batch, -1).astype(jnp.float32)            # (B, 784)

    # --- pad / cast parameters (tiny, math-preserving) ---
    w1_p = jnp.pad(w1_t.astype(jnp.float32),
                   ((0, 0), (0, H_PAD - HIDDEN))).astype(jnp.bfloat16)        # (784,128)
    b1_p = jnp.pad(b1.astype(jnp.float32).reshape(1, HIDDEN),
                   ((0, 0), (0, H_PAD - HIDDEN)))                             # (1,128)
    w2_p = jnp.pad(w2_t.astype(jnp.float32),
                   ((0, H_PAD - HIDDEN), (0, C_PAD - NUM_CLASSES))
                   ).astype(jnp.bfloat16)                                     # (128,128)
    b2_p = jnp.pad(b2.astype(jnp.float32).reshape(1, NUM_CLASSES),
                   ((0, 0), (0, C_PAD - NUM_CLASSES)), constant_values=NEG_BIG)

    # --- batch tiling: single pad of x (batch remainder only) ---
    tile_m = _choose_tile_m(batch, tm)
    b_pad = _round_up(batch, tile_m)
    if b_pad != batch:
        x_flat = jnp.pad(x_flat, ((0, b_pad - batch), (0, 0)))
    grid = (b_pad // tile_m,)

    cost = pl.CostEstimate(
        flops=2 * b_pad * IN_FEATURES * H_PAD + 2 * b_pad * H_PAD * C_PAD,
        transcendentals=b_pad * (H_PAD + C_PAD),
        bytes_accessed=(b_pad * IN_FEATURES * 4        # x (f32, read once)
                        + IN_FEATURES * H_PAD * 2      # w1 (bf16)
                        + H_PAD * C_PAD * 2            # w2 (bf16)
                        + (H_PAD + C_PAD) * 4          # biases (f32)
                        + b_pad * C_PAD * 4),          # output (f32)
    )

    out_p = pl.pallas_call(
        netfull_kernel,
        out_shape=jax.ShapeDtypeStruct((b_pad, C_PAD), jnp.float32),
        grid=grid,
        in_specs=[
            pl.BlockSpec((tile_m, IN_FEATURES), lambda i: (i, 0)),   # x tile (pipelined)
            pl.BlockSpec((IN_FEATURES, H_PAD), lambda i: (0, 0)),    # w1 (resident)
            pl.BlockSpec((1, H_PAD), lambda i: (0, 0)),              # b1 (resident)
            pl.BlockSpec((H_PAD, C_PAD), lambda i: (0, 0)),          # w2 (resident)
            pl.BlockSpec((1, C_PAD), lambda i: (0, 0)),              # b2 (resident)
        ],
        out_specs=pl.BlockSpec((tile_m, C_PAD), lambda i: (i, 0)),
        compiler_params=pltpu.CompilerParams(
            dimension_semantics=("parallel",),
            vmem_limit_bytes=48 << 20),   # f32 x tiles @ tm=2048 exceed v5e's 16 MiB default
        cost_estimate=cost,
    )(x_flat, w1_p, b1_p, w2_p, b2_p)

    return out_p[:batch, :NUM_CLASSES]


def init_params(key):
    """Deterministic init mimicking nn.Linear's U(-1/sqrt(fan_in), 1/sqrt(fan_in)).
    Weights are created directly in transposed (in, out) layout."""
    k1, k2, k3, k4 = jax.random.split(key, 4)
    bound1 = 1.0 / math.sqrt(IN_FEATURES)
    bound2 = 1.0 / math.sqrt(HIDDEN)
    w1_t = jax.random.uniform(k1, (IN_FEATURES, HIDDEN), jnp.float32, -bound1, bound1)
    b1 = jax.random.uniform(k2, (HIDDEN,), jnp.float32, -bound1, bound1)
    w2_t = jax.random.uniform(k3, (HIDDEN, NUM_CLASSES), jnp.float32, -bound2, bound2)
    b2 = jax.random.uniform(k4, (NUM_CLASSES,), jnp.float32, -bound2, bound2)
    return w1_t, b1, w2_t, b2


def reference_forward(x_nchw, w1_t, b1, w2_t, b2):
    """Pure-JAX f32 reference for correctness checking."""
    x = x_nchw.reshape(x_nchw.shape[0], -1).astype(jnp.float32)
    h = jnp.tanh(x @ w1_t + b1)
    logits = h @ w2_t + b2
    return jax.nn.log_softmax(logits, axis=-1)


if __name__ == "__main__":
    key = jax.random.PRNGKey(0)
    kx, kp = jax.random.split(key)

    batch = 2
    x = jax.random.normal(kx, (batch, 1, 28, 28), jnp.float32)  # NCHW, like MNIST
    w1_t, b1, w2_t, b2 = init_params(kp)

    fwd = jax.jit(netfull_forward, static_argnames=("tm",))
    out = fwd(x, w1_t, b1, w2_t, b2)
    out = jax.block_until_ready(out)

    ref = reference_forward(x, w1_t, b1, w2_t, b2)
    assert out.shape == (batch, NUM_CLASSES)
    # bf16 matmul inputs (f32 accumulation) -> slightly looser tolerance than pure f32
    assert jnp.max(jnp.abs(out - ref)) < 3e-2, "mismatch vs JAX reference"

    print("KERNEL_OK")
</pallas_src>

<mosaic_0001>
module attributes {stable_mosaic.version = 11 : i64} {
  func.func @netfull_kernel(%arg0: i32, %arg1: memref<8x784xf32, #tpu.memory_space<vmem>>, %arg2: memref<784x128xbf16, #tpu.memory_space<vmem>>, %arg3: memref<1x128xf32, #tpu.memory_space<vmem>>, %arg4: memref<128x128xbf16, #tpu.memory_space<vmem>>, %arg5: memref<1x128xf32, #tpu.memory_space<vmem>>, %arg6: memref<8x128xf32, #tpu.memory_space<vmem>>) attributes {dimension_semantics = [#tpu.dimension_semantics<parallel>], iteration_bounds = array<i64: 1>, scalar_prefetch = 0 : i64, scratch_operands = 0 : i64, tpu.core_type = #tpu.core_type<tc>, window_params = [{transform_indices = @transform_0, window_bounds = array<i64: 8, 784>}, {pipeline_mode = #tpu.pipeline_mode<synchronous>, transform_indices = @transform_1, window_bounds = array<i64: 784, 128>}, {pipeline_mode = #tpu.pipeline_mode<synchronous>, transform_indices = @transform_2, window_bounds = array<i64: 1, 128>}, {pipeline_mode = #tpu.pipeline_mode<synchronous>, transform_indices = @transform_3, window_bounds = array<i64: 128, 128>}, {pipeline_mode = #tpu.pipeline_mode<synchronous>, transform_indices = @transform_4, window_bounds = array<i64: 1, 128>}, {transform_indices = @transform_5, window_bounds = array<i64: 8, 128>}]} {
    %c0 = arith.constant 0 : index
    %c0_0 = arith.constant 0 : index
    %0 = vector.load %arg1[%c0, %c0_0] : memref<8x784xf32, #tpu.memory_space<vmem>>, vector<8x784xf32>
    %1 = arith.truncf %0 : vector<8x784xf32> to vector<8x784xbf16>
    %c0_1 = arith.constant 0 : index
    %c0_2 = arith.constant 0 : index
    %2 = vector.load %arg2[%c0_1, %c0_2] : memref<784x128xbf16, #tpu.memory_space<vmem>>, vector<784x128xbf16>
    %cst = arith.constant dense<0.000000e+00> : vector<8x128xf32>
    %3 = tpu.matmul %1, %2, %cst {dimension_numbers = #tpu.dot_dimension_numbers<[1], [0], [0], [1], [0, 0, 1, 1], [], []>} : vector<8x784xbf16>, vector<784x128xbf16>, vector<8x128xf32> -> vector<8x128xf32>
    %c0_3 = arith.constant 0 : index
    %c0_4 = arith.constant 0 : index
    %4 = vector.load %arg3[%c0_3, %c0_4] : memref<1x128xf32, #tpu.memory_space<vmem>>, vector<1x128xf32>
    %5 = vector.broadcast %4 : vector<1x128xf32> to vector<8x128xf32>
    %6 = arith.addf %3, %5 : vector<8x128xf32>
    %7 = math.tanh %6 : vector<8x128xf32>
    %8 = arith.truncf %7 : vector<8x128xf32> to vector<8x128xbf16>
    %c0_5 = arith.constant 0 : index
    %c0_6 = arith.constant 0 : index
    %9 = vector.load %arg4[%c0_5, %c0_6] : memref<128x128xbf16, #tpu.memory_space<vmem>>, vector<128x128xbf16>
    %cst_7 = arith.constant dense<0.000000e+00> : vector<8x128xf32>
    %10 = tpu.matmul %8, %9, %cst_7 {dimension_numbers = #tpu.dot_dimension_numbers<[1], [0], [0], [1], [0, 0, 1, 1], [], []>} : vector<8x128xbf16>, vector<128x128xbf16>, vector<8x128xf32> -> vector<8x128xf32>
    %c0_8 = arith.constant 0 : index
    %c0_9 = arith.constant 0 : index
    %11 = vector.load %arg5[%c0_8, %c0_9] : memref<1x128xf32, #tpu.memory_space<vmem>>, vector<1x128xf32>
    %12 = vector.broadcast %11 : vector<1x128xf32> to vector<8x128xf32>
    %13 = arith.addf %10, %12 : vector<8x128xf32>
    %cst_10 = arith.constant dense<0xFF800000> : vector<8xf32>
    %14 = vector.multi_reduction <maximumf>, %13, %cst_10 [1] : vector<8x128xf32> to vector<8xf32>
    %15 = vector.shape_cast %14 : vector<8xf32> to vector<8x1xf32>
    %16 = vector.broadcast %15 : vector<8x1xf32> to vector<8x128xf32>
    %17 = arith.subf %13, %16 : vector<8x128xf32>
    %18 = math.exp %17 : vector<8x128xf32>
    %cst_11 = arith.constant dense<0.000000e+00> : vector<8xf32>
    %19 = vector.multi_reduction <add>, %18, %cst_11 [1] : vector<8x128xf32> to vector<8xf32>
    %20 = vector.shape_cast %19 : vector<8xf32> to vector<8x1xf32>
    %21 = math.log %20 : vector<8x1xf32>
    %22 = vector.broadcast %21 : vector<8x1xf32> to vector<8x128xf32>
    %23 = arith.subf %17, %22 : vector<8x128xf32>
    %c0_12 = arith.constant 0 : index
    %c0_13 = arith.constant 0 : index
    %24 = vector.load %arg6[%c0_12, %c0_13] : memref<8x128xf32, #tpu.memory_space<vmem>>, vector<8x128xf32>
    tpu.vector_store %arg6[%c0_12, %c0_13], %23 {strides = array<i32>} : memref<8x128xf32, #tpu.memory_space<vmem>>, vector<8x128xf32>,
    return
  }
  func.func @transform_0(%arg0: i32) -> (i32, i32) {
    %c0_i32 = arith.constant 0 : i32
    %c0_i32_0 = arith.constant 0 : i32
    return %arg0, %c0_i32 : i32, i32
  }
  func.func @transform_1(%arg0: i32) -> (i32, i32) {
    %c0_i32 = arith.constant 0 : i32
    %c0_i32_0 = arith.constant 0 : i32
    %c0_i32_1 = arith.constant 0 : i32
    return %c0_i32, %c0_i32_0 : i32, i32
  }
  func.func @transform_2(%arg0: i32) -> (i32, i32) {
    %c0_i32 = arith.constant 0 : i32
    %c0_i32_0 = arith.constant 0 : i32
    %c0_i32_1 = arith.constant 0 : i32
    return %c0_i32, %c0_i32_0 : i32, i32
  }
  func.func @transform_3(%arg0: i32) -> (i32, i32) {
    %c0_i32 = arith.constant 0 : i32
    %c0_i32_0 = arith.constant 0 : i32
    %c0_i32_1 = arith.constant 0 : i32
    return %c0_i32, %c0_i32_0 : i32, i32
  }
  func.func @transform_4(%arg0: i32) -> (i32, i32) {
    %c0_i32 = arith.constant 0 : i32
    %c0_i32_0 = arith.constant 0 : i32
    %c0_i32_1 = arith.constant 0 : i32
    return %c0_i32, %c0_i32_0 : i32, i32
  }
  func.func @transform_5(%arg0: i32) -> (i32, i32) {
    %c0_i32 = arith.constant 0 : i32
    %c0_i32_0 = arith.constant 0 : i32
    return %arg0, %c0_i32 : i32, i32
  }
}

</mosaic_0001>

<llo_original>
// kernel: netfull_forward.1
$region0: #{netfull_forward.1}
  #allocation0 [shape = 'u32[]', space=smem, size = 0x4, offset = 0x4, fixed_abs, tag = 'smem constant byte address 0x4 - core index']
  #allocation1 [shape = 'u32[72,128]{1,0:T(1,128)}', space=vmem, size = 0x9000, scoped, tag = 'internal scratch']
  %s0 = inlined_call_operand.vmem [shape: f32[8,784], index: 0, kind: input, shape index: {}]
  %s1 = inlined_call_operand.vmem [shape: bf16[784,128], index: 1, kind: input, shape index: {}]
  %s2 = inlined_call_operand.vmem [shape: f32[1,128], index: 2, kind: input, shape index: {}]
  %s3 = inlined_call_operand.vmem [shape: bf16[128,128], index: 3, kind: input, shape index: {}]
  %s4 = inlined_call_operand.vmem [shape: f32[1,128], index: 4, kind: input, shape index: {}]
  %s5 = inlined_call_operand.vmem [shape: f32[8,128], index: 5, kind: output, shape index: {}]
  %s6 = sld [smem:[#allocation0]]
  $region30: #{netfull_forward.1} parent=0
    _
  %s8 = ssub.s32 1, %s6
  %s9 = scalar_select 0, %s8, %s6
  // Predicated region
  $region2: #{netfull_forward.1} parent=0 // pred_check
    _
  $region3: #{netfull_forward.1} parent=0 // pred_check_branch
    %11 = sbr.rel (0) target = $region5
  $region4: #{netfull_forward.1} parent=0 // pred_region
    _
  $region5: #{netfull_forward.1} parent=0 // pred_fallthru
    _
  // Predicated region
  $region6: #{netfull_forward.1} parent=0 // pred_check
    _
  $region7: #{netfull_forward.1} parent=0 // pred_check_branch
    %13 = sbr.rel (0) target = $region9
  $region8: #{netfull_forward.1} parent=0 // pred_region
    _
  $region9: #{netfull_forward.1} parent=0 // pred_fallthru
    _
  // Predicated region
  $region10: #{netfull_forward.1} parent=0 // pred_check
    _
  $region11: #{netfull_forward.1} parent=0 // pred_check_branch
    %15 = sbr.rel (0) target = $region13
  $region12: #{netfull_forward.1} parent=0 // pred_region
    _
  $region13: #{netfull_forward.1} parent=0 // pred_fallthru
    _
  // Predicated region
  $region14: #{netfull_forward.1} parent=0 // pred_check
    _
  $region15: #{netfull_forward.1} parent=0 // pred_check_branch
    %17 = sbr.rel (0) target = $region17
  $region16: #{netfull_forward.1} parent=0 // pred_region
    _
  $region17: #{netfull_forward.1} parent=0 // pred_fallthru
    _
  // Predicated region
  $region18: #{netfull_forward.1} parent=0 // pred_check
    _
  $region19: #{netfull_forward.1} parent=0 // pred_check_branch
    %19 = sbr.rel (0) target = $region21
  $region20: #{netfull_forward.1} parent=0 // pred_region
    _
  $region21: #{netfull_forward.1} parent=0 // pred_fallthru
    _
  %v21 = vld [vmem:[%s0] sm:$0xff]
  %v22 = vld [vmem:[%s0 + $0x8] sm:$0xff]
  %v23 = vld [vmem:[%s0 + $0x10] sm:$0xff]
  %v24 = vld [vmem:[%s0 + $0x18] sm:$0xff]
  %v25 = vld [vmem:[%s0 + $0x20] sm:$0xff]
  %v26 = vld [vmem:[%s0 + $0x28] sm:$0xff]
  %v27 = vld [vmem:[%s0 + $0x30] sm:$0xff]
  %v28 = vpack.c.bf16 %v21, %v21
  %v29 = vpack.c.bf16 %v22, %v22
  %v30 = vpack.c.bf16 %v23, %v23
  %v31 = vpack.c.bf16 %v24, %v24
  %v32 = vpack.c.bf16 %v25, %v25
  %v33 = vpack.c.bf16 %v26, %v26
  %v34 = vpack.c.bf16 %v27, %v27
  %v35 = vld [vmem:[%s1] sm:$0xf]
  %v36 = vld [vmem:[%s1 + $0x4] sm:$0xf]
  %v37 = vld [vmem:[%s1 + $0x8] sm:$0xf]
  %v38 = vld [vmem:[%s1 + $0xc] sm:$0xf]
  %v39 = vld [vmem:[%s1 + $0x10] sm:$0xf]
  %v40 = vld [vmem:[%s1 + $0x14] sm:$0xf]
  %v41 = vld [vmem:[%s1 + $0x18] sm:$0xf]
  %v42 = vld [vmem:[%s1 + $0x1c] sm:$0xf]
  %v43 = vld [vmem:[%s1 + $0x20] sm:$0xf]
  %v44 = vld [vmem:[%s1 + $0x24] sm:$0xf]
  %v45 = vld [vmem:[%s1 + $0x28] sm:$0xf]
  %v46 = vld [vmem:[%s1 + $0x2c] sm:$0xf]
  %v47 = vld [vmem:[%s1 + $0x30] sm:$0xf]
  %v48 = vld [vmem:[%s1 + $0x34] sm:$0xf]
  %v49 = vld [vmem:[%s1 + $0x38] sm:$0xf]
  %v50 = vld [vmem:[%s1 + $0x3c] sm:$0xf]
  %v51 = vld [vmem:[%s1 + $0x40] sm:$0xf]
  %v52 = vld [vmem:[%s1 + $0x44] sm:$0xf]
  %v53 = vld [vmem:[%s1 + $0x48] sm:$0xf]
  %v54 = vld [vmem:[%s1 + $0x4c] sm:$0xf]
  %v55 = vld [vmem:[%s1 + $0x50] sm:$0xf]
  %v56 = vld [vmem:[%s1 + $0x54] sm:$0xf]
  %v57 = vld [vmem:[%s1 + $0x58] sm:$0xf]
  %v58 = vld [vmem:[%s1 + $0x5c] sm:$0xf]
  %v59 = vld [vmem:[%s1 + $0x60] sm:$0xf]
  %v60 = vld [vmem:[%s1 + $0x64] sm:$0xf]
  %v61 = vld [vmem:[%s1 + $0x68] sm:$0xf]
  %v62 = vld [vmem:[%s1 + $0x6c] sm:$0xf]
  %v63 = vld [vmem:[%s1 + $0x70] sm:$0xf]
  %v64 = vld [vmem:[%s1 + $0x74] sm:$0xf]
  %v65 = vld [vmem:[%s1 + $0x78] sm:$0xf]
  %v66 = vld [vmem:[%s1 + $0x7c] sm:$0xf]
  %v67 = vld [vmem:[%s1 + $0x80] sm:$0xf]
  %v68 = vld [vmem:[%s1 + $0x84] sm:$0xf]
  %v69 = vld [vmem:[%s1 + $0x88] sm:$0xf]
  %v70 = vld [vmem:[%s1 + $0x8c] sm:$0xf]
  %v71 = vld [vmem:[%s1 + $0x90] sm:$0xf]
  %v72 = vld [vmem:[%s1 + $0x94] sm:$0xf]
  %v73 = vld [vmem:[%s1 + $0x98] sm:$0xf]
  %v74 = vld [vmem:[%s1 + $0x9c] sm:$0xf]
  %v75 = vld [vmem:[%s1 + $0xa0] sm:$0xf]
  %v76 = vld [vmem:[%s1 + $0xa4] sm:$0xf]
  %v77 = vld [vmem:[%s1 + $0xa8] sm:$0xf]
  %v78 = vld [vmem:[%s1 + $0xac] sm:$0xf]
  %v79 = vld [vmem:[%s1 + $0xb0] sm:$0xf]
  %v80 = vld [vmem:[%s1 + $0xb4] sm:$0xf]
  %v81 = vld [vmem:[%s1 + $0xb8] sm:$0xf]
  %v82 = vld [vmem:[%s1 + $0xbc] sm:$0xf]
  %v83 = vld [vmem:[%s1 + $0xc0] sm:$0xf]
  %v84 = vld [vmem:[%s1 + $0xc4] sm:$0xf]
  %v85 = vld [vmem:[%s1 + $0xc8] sm:$0xf]
  %v86 = vld [vmem:[%s1 + $0xcc] sm:$0xf]
  %v87 = vld [vmem:[%s1 + $0xd0] sm:$0xf]
  %v88 = vld [vmem:[%s1 + $0xd4] sm:$0xf]
  %v89 = vld [vmem:[%s1 + $0xd8] sm:$0xf]
  %v90 = vld [vmem:[%s1 + $0xdc] sm:$0xf]
  %v91 = vld [vmem:[%s1 + $0xe0] sm:$0xf]
  %v92 = vld [vmem:[%s1 + $0xe4] sm:$0xf]
  %v93 = vld [vmem:[%s1 + $0xe8] sm:$0xf]
  %v94 = vld [vmem:[%s1 + $0xec] sm:$0xf]
  %v95 = vld [vmem:[%s1 + $0xf0] sm:$0xf]
  %v96 = vld [vmem:[%s1 + $0xf4] sm:$0xf]
  %v97 = vld [vmem:[%s1 + $0xf8] sm:$0xf]
  %v98 = vld [vmem:[%s1 + $0xfc] sm:$0xf]
  %v99 = vld [vmem:[%s1 + $0x100] sm:$0xf]
  %v100 = vld [vmem:[%s1 + $0x104] sm:$0xf]
  %v101 = vld [vmem:[%s1 + $0x108] sm:$0xf]
  %v102 = vld [vmem:[%s1 + $0x10c] sm:$0xf]
  %v103 = vld [vmem:[%s1 + $0x110] sm:$0xf]
  %v104 = vld [vmem:[%s1 + $0x114] sm:$0xf]
  %v105 = vld [vmem:[%s1 + $0x118] sm:$0xf]
  %v106 = vld [vmem:[%s1 + $0x11c] sm:$0xf]
  %v107 = vld [vmem:[%s1 + $0x120] sm:$0xf]
  %v108 = vld [vmem:[%s1 + $0x124] sm:$0xf]
  %v109 = vld [vmem:[%s1 + $0x128] sm:$0xf]
  %v110 = vld [vmem:[%s1 + $0x12c] sm:$0xf]
  %v111 = vld [vmem:[%s1 + $0x130] sm:$0xf]
  %v112 = vld [vmem:[%s1 + $0x134] sm:$0xf]
  %v113 = vld [vmem:[%s1 + $0x138] sm:$0xf]
  %v114 = vld [vmem:[%s1 + $0x13c] sm:$0xf]
  %v115 = vld [vmem:[%s1 + $0x140] sm:$0xf]
  %v116 = vld [vmem:[%s1 + $0x144] sm:$0xf]
  %v117 = vld [vmem:[%s1 + $0x148] sm:$0xf]
  %v118 = vld [vmem:[%s1 + $0x14c] sm:$0xf]
  %v119 = vld [vmem:[%s1 + $0x150] sm:$0xf]
  %v120 = vld [vmem:[%s1 + $0x154] sm:$0xf]
  %v121 = vld [vmem:[%s1 + $0x158] sm:$0xf]
  %v122 = vld [vmem:[%s1 + $0x15c] sm:$0xf]
  %v123 = vld [vmem:[%s1 + $0x160] sm:$0xf]
  %v124 = vld [vmem:[%s1 + $0x164] sm:$0xf]
  %v125 = vld [vmem:[%s1 + $0x168] sm:$0xf]
  %v126 = vld [vmem:[%s1 + $0x16c] sm:$0xf]
  %v127 = vld [vmem:[%s1 + $0x170] sm:$0xf]
  %v128 = vld [vmem:[%s1 + $0x174] sm:$0xf]
  %v129 = vld [vmem:[%s1 + $0x178] sm:$0xf]
  %v130 = vld [vmem:[%s1 + $0x17c] sm:$0xf]
  %v131 = vld [vmem:[%s1 + $0x180] sm:$0xf]
  %v132 = vld [vmem:[%s1 + $0x184] sm:$0xf]
  %v133 = vld [vmem:[%s2] sm:$0x1]
  %v135 = vperm.slane %v133, 0
  %v235 = vunpack.c.l.b16 %v35
  %v236 = vunpack.c.l.b16 %v36
  %v237 = vunpack.c.l.b16 %v37
  %v238 = vunpack.c.l.b16 %v38
  %v239 = vunpack.c.l.b16 %v39
  %v240 = vunpack.c.l.b16 %v40
  %v241 = vunpack.c.l.b16 %v41
  %v242 = vunpack.c.l.b16 %v42
  %v243 = vunpack.c.l.b16 %v43
  %v244 = vunpack.c.l.b16 %v44
  %v245 = vunpack.c.l.b16 %v45
  %v246 = vunpack.c.l.b16 %v46
  %v247 = vunpack.c.l.b16 %v47
  %v248 = vunpack.c.l.b16 %v48
  %v249 = vunpack.c.l.b16 %v49
  %v250 = vunpack.c.l.b16 %v50
  %v251 = vunpack.c.l.b16 %v51
  %v252 = vunpack.c.l.b16 %v52
  %v253 = vunpack.c.l.b16 %v53
  %v254 = vunpack.c.l.b16 %v54
  %v255 = vunpack.c.l.b16 %v55
  %v256 = vunpack.c.l.b16 %v56
  %v257 = vunpack.c.l.b16 %v57
  %v258 = vunpack.c.l.b16 %v58
  %v259 = vunpack.c.l.b16 %v59
  %v260 = vunpack.c.l.b16 %v60
  %v261 = vunpack.c.l.b16 %v61
  %v262 = vunpack.c.l.b16 %v62
  %v263 = vunpack.c.l.b16 %v63
  %v264 = vunpack.c.l.b16 %v64
  %v265 = vunpack.c.l.b16 %v65
  %v266 = vunpack.c.l.b16 %v66
  %v267 = vunpack.c.l.b16 %v67
  %v268 = vunpack.c.l.b16 %v68
  %v269 = vunpack.c.l.b16 %v69
  %v270 = vunpack.c.l.b16 %v70
  %v271 = vunpack.c.l.b16 %v71
  %v272 = vunpack.c.l.b16 %v72
  %v273 = vunpack.c.l.b16 %v73
  %v274 = vunpack.c.l.b16 %v74
  %v275 = vunpack.c.l.b16 %v75
  %v276 = vunpack.c.l.b16 %v76
  %v277 = vunpack.c.l.b16 %v77
  %v278 = vunpack.c.l.b16 %v78
  %v279 = vunpack.c.l.b16 %v79
  %v280 = vunpack.c.l.b16 %v80
  %v281 = vunpack.c.l.b16 %v81
  %v282 = vunpack.c.l.b16 %v82
  %v283 = vunpack.c.l.b16 %v83
  %v284 = vunpack.c.l.b16 %v84
  %v285 = vunpack.c.l.b16 %v85
  %v286 = vunpack.c.l.b16 %v86
  %v287 = vunpack.c.l.b16 %v87
  %v288 = vunpack.c.l.b16 %v88
  %v289 = vunpack.c.l.b16 %v89
  %v290 = vunpack.c.l.b16 %v90
  %v291 = vunpack.c.l.b16 %v91
  %v292 = vunpack.c.l.b16 %v92
  %v293 = vunpack.c.l.b16 %v93
  %v294 = vunpack.c.l.b16 %v94
  %v295 = vunpack.c.l.b16 %v95
  %v296 = vunpack.c.l.b16 %v96
  %v297 = vunpack.c.l.b16 %v97
  %v298 = vunpack.c.l.b16 %v98
  %v299 = vunpack.c.l.b16 %v99
  %v300 = vunpack.c.l.b16 %v100
  %v301 = vunpack.c.l.b16 %v101
  %v302 = vunpack.c.l.b16 %v102
  %v303 = vunpack.c.l.b16 %v103
  %v304 = vunpack.c.l.b16 %v104
  %v305 = vunpack.c.l.b16 %v105
  %v306 = vunpack.c.l.b16 %v106
  %v307 = vunpack.c.l.b16 %v107
  %v308 = vunpack.c.l.b16 %v108
  %v309 = vunpack.c.l.b16 %v109
  %v310 = vunpack.c.l.b16 %v110
  %v311 = vunpack.c.l.b16 %v111
  %v312 = vunpack.c.l.b16 %v112
  %v313 = vunpack.c.l.b16 %v113
  %v314 = vunpack.c.l.b16 %v114
  %v315 = vunpack.c.l.b16 %v115
  %v316 = vunpack.c.l.b16 %v116
  %v317 = vunpack.c.l.b16 %v117
  %v318 = vunpack.c.l.b16 %v118
  %v319 = vunpack.c.l.b16 %v119
  %v320 = vunpack.c.l.b16 %v120
  %v321 = vunpack.c.l.b16 %v121
  %v322 = vunpack.c.l.b16 %v122
  %v323 = vunpack.c.l.b16 %v123
  %v324 = vunpack.c.l.b16 %v124
  %v325 = vunpack.c.l.b16 %v125
  %v326 = vunpack.c.l.b16 %v126
  %v327 = vunpack.c.l.b16 %v127
  %v328 = vunpack.c.l.b16 %v128
  %v329 = vunpack.c.l.b16 %v129
  %v330 = vunpack.c.l.b16 %v130
  %v331 = vunpack.c.l.b16 %v131
  %v332 = vunpack.c.l.b16 %v132
  %v333 = vpack.c.b16 %v236, %v235
  %v334 = vpack.c.b16 %v238, %v237
  %v335 = vpack.c.b16 %v240, %v239
  %v336 = vpack.c.b16 %v242, %v241
  %v337 = vpack.c.b16 %v244, %v243
  %v338 = vpack.c.b16 %v246, %v245
  %v339 = vpack.c.b16 %v248, %v247
  %v340 = vpack.c.b16 %v250, %v249
  %v341 = vpack.c.b16 %v252, %v251
  %v342 = vpack.c.b16 %v254, %v253
  %v343 = vpack.c.b16 %v256, %v255
  %v344 = vpack.c.b16 %v258, %v257
  %v345 = vpack.c.b16 %v260, %v259
  %v346 = vpack.c.b16 %v262, %v261
  %v347 = vpack.c.b16 %v264, %v263
  %v348 = vpack.c.b16 %v266, %v265
  %v349 = vpack.c.b16 %v268, %v267
  %v350 = vpack.c.b16 %v270, %v269
  %v351 = vpack.c.b16 %v272, %v271
  %v352 = vpack.c.b16 %v274, %v273
  %v353 = vpack.c.b16 %v276, %v275
  %v354 = vpack.c.b16 %v278, %v277
  %v355 = vpack.c.b16 %v280, %v279
  %v356 = vpack.c.b16 %v282, %v281
  %v357 = vpack.c.b16 %v284, %v283
  %v358 = vpack.c.b16 %v286, %v285
  %v359 = vpack.c.b16 %v288, %v287
  %v360 = vpack.c.b16 %v290, %v289
  %v361 = vpack.c.b16 %v292, %v291
  %v362 = vpack.c.b16 %v294, %v293
  %v363 = vpack.c.b16 %v296, %v295
  %v364 = vpack.c.b16 %v298, %v297
  %v365 = vpack.c.b16 %v300, %v299
  %v366 = vpack.c.b16 %v302, %v301
  %v367 = vpack.c.b16 %v304, %v303
  %v368 = vpack.c.b16 %v306, %v305
  %v369 = vpack.c.b16 %v308, %v307
  %v370 = vpack.c.b16 %v310, %v309
  %v371 = vpack.c.b16 %v312, %v311
  %v372 = vpack.c.b16 %v314, %v313
  %v373 = vpack.c.b16 %v316, %v315
  %v374 = vpack.c.b16 %v318, %v317
  %v375 = vpack.c.b16 %v320, %v319
  %v376 = vpack.c.b16 %v322, %v321
  %v377 = vpack.c.b16 %v324, %v323
  %v378 = vpack.c.b16 %v326, %v325
  %v379 = vpack.c.b16 %v328, %v327
  %v380 = vpack.c.b16 %v330, %v329
  %v381 = vpack.c.b16 %v332, %v331
  %vm431 = vcmask 130048
  %v433 = vsel %vm431, %v34, 0
  %435 = vmatpush.bf16.msra.mxu0 %v340
  %436 = vmatpush.bf16.msra.mxu0 %v339
  %437 = vmatpush.bf16.msra.mxu0 %v338
  %438 = vmatpush.bf16.msra.mxu0 %v337
  %439 = vmatpush.bf16.msra.mxu0 %v336
  %440 = vmatpush.bf16.msra.mxu0 %v335
  %441 = vmatpush.bf16.msra.mxu0 %v334
  %442 = vmatpush.bf16.msra.mxu0 %v333
  %443 = vmatmul.bf16.gmra.mxu0 %v28
  %v444 = vpop.f32.mrf.mxu0
  %v445 = vadd.f32 %v135, %v444
  %v446 = vpop.f32.mrf.mxu0
  %447 = vdwg.mxu0
  %448 = vmatpush.bf16.msra.mxu0 %v348
  %449 = vmatpush.bf16.msra.mxu0 %v347
  %450 = vmatpush.bf16.msra.mxu0 %v346
  %451 = vmatpush.bf16.msra.mxu0 %v345
  %452 = vmatpush.bf16.msra.mxu0 %v344
  %453 = vmatpush.bf16.msra.mxu0 %v343
  %454 = vmatpush.bf16.msra.mxu0 %v342
  %455 = vmatpush.bf16.msra.mxu0 %v341
  %456 = vmatmul.bf16.gmra.mxu0 %v29
  %v457 = vpop.f32.mrf.mxu0
  %v458 = vadd.f32 %v445, %v457
  %v459 = vpop.f32.mrf.mxu0
  %460 = vdwg.mxu0
  %461 = vmatpush.bf16.msra.mxu0 %v356
  %462 = vmatpush.bf16.msra.mxu0 %v355
  %463 = vmatpush.bf16.msra.mxu0 %v354
  %464 = vmatpush.bf16.msra.mxu0 %v353
  %465 = vmatpush.bf16.msra.mxu0 %v352
  %466 = vmatpush.bf16.msra.mxu0 %v351
  %467 = vmatpush.bf16.msra.mxu0 %v350
  %468 = vmatpush.bf16.msra.mxu0 %v349
  %469 = vmatmul.bf16.gmra.mxu0 %v30
  %v470 = vpop.f32.mrf.mxu0
  %v471 = vadd.f32 %v458, %v470
  %v472 = vpop.f32.mrf.mxu0
  %473 = vdwg.mxu0
  %474 = vmatpush.bf16.msra.mxu0 %v364
  %475 = vmatpush.bf16.msra.mxu0 %v363
  %476 = vmatpush.bf16.msra.mxu0 %v362
  %477 = vmatpush.bf16.msra.mxu0 %v361
  %478 = vmatpush.bf16.msra.mxu0 %v360
  %479 = vmatpush.bf16.msra.mxu0 %v359
  %480 = vmatpush.bf16.msra.mxu0 %v358
  %481 = vmatpush.bf16.msra.mxu0 %v357
  %482 = vmatmul.bf16.gmra.mxu0 %v31
  %v483 = vpop.f32.mrf.mxu0
  %v484 = vadd.f32 %v471, %v483
  %v485 = vpop.f32.mrf.mxu0
  %486 = vdwg.mxu0
  %487 = vmatpush.bf16.msra.mxu0 %v372
  %488 = vmatpush.bf16.msra.mxu0 %v371
  %489 = vmatpush.bf16.msra.mxu0 %v370
  %490 = vmatpush.bf16.msra.mxu0 %v369
  %491 = vmatpush.bf16.msra.mxu0 %v368
  %492 = vmatpush.bf16.msra.mxu0 %v367
  %493 = vmatpush.bf16.msra.mxu0 %v366
  %494 = vmatpush.bf16.msra.mxu0 %v365
  %495 = vmatmul.bf16.gmra.mxu0 %v32
  %v496 = vpop.f32.mrf.mxu0
  %v497 = vadd.f32 %v484, %v496
  %v498 = vpop.f32.mrf.mxu0
  %499 = vdwg.mxu0
  %500 = vmatpush.bf16.msra.mxu0 %v380
  %501 = vmatpush.bf16.msra.mxu0 %v379
  %502 = vmatpush.bf16.msra.mxu0 %v378
  %503 = vmatpush.bf16.msra.mxu0 %v377
  %504 = vmatpush.bf16.msra.mxu0 %v376
  %505 = vmatpush.bf16.msra.mxu0 %v375
  %506 = vmatpush.bf16.msra.mxu0 %v374
  %507 = vmatpush.bf16.msra.mxu0 %v373
  %508 = vmatmul.bf16.gmra.mxu0 %v33
  %v509 = vpop.f32.mrf.mxu0
  %v510 = vadd.f32 %v497, %v509
  %v511 = vpop.f32.mrf.mxu0
  %512 = vdwg.mxu0
  %513 = vmatpush.bf16.msra.mxu0 0
  %514 = vmatpush.bf16.msra.mxu0 0
  %515 = vmatpush.bf16.msra.mxu0 0
  %516 = vmatpush.bf16.msra.mxu0 0
  %517 = vmatpush.bf16.msra.mxu0 0
  %518 = vmatpush.bf16.msra.mxu0 0
  %519 = vmatpush.bf16.msra.mxu0 0
  %520 = vmatpush.bf16.msra.mxu0 %v381
  %521 = vmatmul.bf16.gmra.mxu0 %v433
  %v522 = vpop.f32.mrf.mxu0
  %v523 = vadd.f32 %v510, %v522
  %v524 = vpop.f32.mrf.mxu0
  %525 = vdwg.mxu0
  %v526 = vtanh.pop %v523
  %v527 = vpack.c.bf16 %v526, %v526
  %v528 = vld [vmem:[%s3] sm:$0xf]
  %v529 = vld [vmem:[%s3 + $0x4] sm:$0xf]
  %v530 = vld [vmem:[%s3 + $0x8] sm:$0xf]
  %v531 = vld [vmem:[%s3 + $0xc] sm:$0xf]
  %v532 = vld [vmem:[%s3 + $0x10] sm:$0xf]
  %v533 = vld [vmem:[%s3 + $0x14] sm:$0xf]
  %v534 = vld [vmem:[%s3 + $0x18] sm:$0xf]
  %v535 = vld [vmem:[%s3 + $0x1c] sm:$0xf]
  %v536 = vld [vmem:[%s3 + $0x20] sm:$0xf]
  %v537 = vld [vmem:[%s3 + $0x24] sm:$0xf]
  %v538 = vld [vmem:[%s3 + $0x28] sm:$0xf]
  %v539 = vld [vmem:[%s3 + $0x2c] sm:$0xf]
  %v540 = vld [vmem:[%s3 + $0x30] sm:$0xf]
  %v541 = vld [vmem:[%s3 + $0x34] sm:$0xf]
  %v542 = vld [vmem:[%s3 + $0x38] sm:$0xf]
  %v543 = vld [vmem:[%s3 + $0x3c] sm:$0xf]
  %v544 = vld [vmem:[%s4] sm:$0x1]
  %v546 = vperm.slane %v544, 0
  %v564 = vunpack.c.l.b16 %v528
  %v565 = vunpack.c.l.b16 %v529
  %v566 = vunpack.c.l.b16 %v530
  %v567 = vunpack.c.l.b16 %v531
  %v568 = vunpack.c.l.b16 %v532
  %v569 = vunpack.c.l.b16 %v533
  %v570 = vunpack.c.l.b16 %v534
  %v571 = vunpack.c.l.b16 %v535
  %v572 = vunpack.c.l.b16 %v536
  %v573 = vunpack.c.l.b16 %v537
  %v574 = vunpack.c.l.b16 %v538
  %v575 = vunpack.c.l.b16 %v539
  %v576 = vunpack.c.l.b16 %v540
  %v577 = vunpack.c.l.b16 %v541
  %v578 = vunpack.c.l.b16 %v542
  %v579 = vunpack.c.l.b16 %v543
  %v580 = vpack.c.b16 %v565, %v564
  %v581 = vpack.c.b16 %v567, %v566
  %v582 = vpack.c.b16 %v569, %v568
  %v583 = vpack.c.b16 %v571, %v570
  %v584 = vpack.c.b16 %v573, %v572
  %v585 = vpack.c.b16 %v575, %v574
  %v586 = vpack.c.b16 %v577, %v576
  %v587 = vpack.c.b16 %v579, %v578
  %596 = vmatpush.bf16.msra.mxu0 %v587
  %597 = vmatpush.bf16.msra.mxu0 %v586
  %598 = vmatpush.bf16.msra.mxu0 %v585
  %599 = vmatpush.bf16.msra.mxu0 %v584
  %600 = vmatpush.bf16.msra.mxu0 %v583
  %601 = vmatpush.bf16.msra.mxu0 %v582
  %602 = vmatpush.bf16.msra.mxu0 %v581
  %603 = vmatpush.bf16.msra.mxu0 %v580
  %604 = vmatmul.bf16.gmra.mxu0 %v527
  %v605 = vpop.f32.mrf.mxu0
  %v606 = vadd.f32 %v546, %v605
  %v607 = vpop.f32.mrf.mxu0
  %608 = vdwg.mxu0
  %609 = vmax.xlane.f32.xlu0 %v606
  %v610 = vpop.xlane.xlu0 %609
  %v611 = vsub.f32 %v606, %v610
  %v612 = vmul.f32 %v611, 1.442695
  %v613 = vpow.pop %v612
  %614 = vadd.xlane.f32.xlu0 %v613
  %v615 = vpop.xlane.xlu0 %614
  %v616 = vlog2.pop %v615
  %v617 = vmul.f32 %v616, 0.6931472
  %v618 = vsub.f32 %v611, %v617
  %619 = vst [vmem:[%s5] sm:$0xff] %v618
  // Predicated region
  $region22: #{netfull_forward.1} parent=0 // pred_check
    _
  $region23: #{netfull_forward.1} parent=0 // pred_check_branch
    %621 = sbr.rel (0) target = $region25
  $region24: #{netfull_forward.1} parent=0 // pred_region
    _
  $region25: #{netfull_forward.1} parent=0 // pred_fallthru
    _
  // Predicated region
  $region26: #{netfull_forward.1} parent=0 // pred_check
    _
  $region27: #{netfull_forward.1} parent=0 // pred_check_branch
    %623 = sbr.rel (0) target = $region29
  $region28: #{netfull_forward.1} parent=0 // pred_region
    _
  $region29: #{netfull_forward.1} parent=0 // pred_fallthru
    _

</llo_original>
